<compile_context>
chip_gen: v6e
topology: v6e:2x2x1
jax: 0.10.0
libtpu: 0.0.40
codegen_flags: <defaults>
</compile_context>

<pallas_src>
import jax
import jax.numpy as jnp
from jax.experimental import pallas as pl
from jax.experimental.pallas import tpu as pltpu

# Fixed hidden sizes from the module definition.
H1, H2 = 20, 10
LANE = 128


# ----------------------------------------------------------------------------
# Kernel
# ----------------------------------------------------------------------------
def sae_kernel(x_ref,
               w1_ref, b1_ref,
               w2_ref, b2_ref,
               w3_ref, b3_ref,
               w4_ref, b4_ref,
               o_ref):
    """Fused 4-layer MLP forward for one batch tile.

    x_ref: (TB, M)       w1: (M, 20)   b1: (1, 20)
                         w2: (20, 10)  b2: (1, 10)
                         w3: (10, 20)  b3: (1, 20)
                         w4: (20, Mp)  b4: (1, Mp)   (Mp = M padded to 128 lanes)
    o_ref: (TB, Mp)
    All matmuls accumulate in f32; sigmoids run in f32.
    """
    f32 = jnp.float32
    x = x_ref[...]

    h = jnp.dot(x, w1_ref[...], preferred_element_type=f32) + b1_ref[...].astype(f32)
    h = jax.nn.sigmoid(h)

    h = (jnp.dot(h.astype(w2_ref.dtype), w2_ref[...], preferred_element_type=f32)
         + b2_ref[...].astype(f32))
    h = jax.nn.sigmoid(h)

    h = (jnp.dot(h.astype(w3_ref.dtype), w3_ref[...], preferred_element_type=f32)
         + b3_ref[...].astype(f32))
    h = jax.nn.sigmoid(h)

    out = (jnp.dot(h.astype(w4_ref.dtype), w4_ref[...], preferred_element_type=f32)
           + b4_ref[...].astype(f32))
    o_ref[...] = out.astype(o_ref.dtype)


# ----------------------------------------------------------------------------
# Small integer helpers
# ----------------------------------------------------------------------------
def _cdiv(a, b):
    return -(-a // b)


def _round_up(x, m):
    return _cdiv(x, m) * m


def _round_down(x, m):
    return (x // m) * m


def _weight_elems(M, Mp):
    # w1 + w2 + w3 + w4(padded) + b1 + b2 + b3 + b4(padded)
    return (M * H1 + H1 * H2 + H2 * H1 + H1 * Mp) + (H1 + H2 + H1 + Mp)


# ----------------------------------------------------------------------------
# Hardware probe (tuning-only: every probe has an explicit conservative
# default, so a failure here never affects numerics, only tile sizing).
# ----------------------------------------------------------------------------
_HW_CACHE = None


def _tpu_hw():
    """Returns (vmem_capacity_bytes, num_tensorcores_per_device)."""
    global _HW_CACHE
    if _HW_CACHE is not None:
        return _HW_CACHE

    vmem_cap = 128 << 20          # v5e/v6e default
    kind = ""
    try:
        kind = jax.devices()[0].device_kind.lower()
    except Exception:             # tuning-only probe; keep defaults
        pass
    try:
        info = pltpu.get_tpu_info()
        cap = getattr(info, "vmem_capacity_bytes", None)
        if cap:
            vmem_cap = int(cap)
    except Exception:             # tuning-only probe; keep defaults
        pass

    # v7x has 2 TensorCores per chip (64 MiB VMEM each); v4/v5p are megacore
    # (2 TCs behind one device); v5e/v6e are single-TC.
    num_tc = 2 if (any(t in kind for t in ("v7", "v4", "v5p"))
                   or vmem_cap <= (96 << 20)) else 1
    if "v7" in kind:
        vmem_cap = min(vmem_cap, 64 << 20)   # per-TC VMEM on v7x

    _HW_CACHE = (vmem_cap, num_tc)
    return _HW_CACHE


_BUF1_OK = None


def _buffered1_supported():
    """Probe once whether BlockSpec accepts pipeline_mode=pl.Buffered(1)
    (used to single-buffer the constant-index weight blocks, freeing VMEM
    for a larger batch tile)."""
    global _BUF1_OK
    if _BUF1_OK is None:
        try:
            pl.BlockSpec((8, 128), lambda i: (0, 0), pipeline_mode=pl.Buffered(1))
            _BUF1_OK = True
        except (TypeError, AttributeError):
            _BUF1_OK = False
    return _BUF1_OK


# ----------------------------------------------------------------------------
# Tiling / VMEM sizing
# ----------------------------------------------------------------------------
def _budgets(vmem_cap):
    """(tile_budget, vmem_limit_cap) derived from physical VMEM."""
    if vmem_cap <= (72 << 20):
        # v7x-class (64 MiB per TC): keep the scoped limit well under capacity
        # so Mosaic has room for internal scratch.
        limit_cap = min(46 << 20, int(0.72 * vmem_cap))
    else:
        # v5e/v6e (128 MiB): use most of it; bigger tiles amortize the
        # ~0.35 us/step pipeline overhead.
        limit_cap = min(100 << 20, int(0.80 * vmem_cap))
    tile_budget = max(limit_cap - (12 << 20), 16 << 20)
    return tile_budget, limit_cap


def _tile_bytes_per_row(M, Mp, in_isz, out_isz):
    # double-buffered x tile + double-buffered out tile
    # + f32 layer-4 matmul result + f32 bias broadcast (both tb x Mp).
    return M * 2 * in_isz + Mp * 2 * out_isz + Mp * 2 * 4


def _pick_tb(B, M, Mp, in_isz, out_isz, tile_budget, num_tc):
    """Largest batch tile whose full VMEM footprint fits the tile budget."""
    weight_bytes = 2 * in_isz * _weight_elems(M, Mp)   # conservative: 2 buffers
    avail = max(tile_budget - weight_bytes, 2 << 20)
    per_row = _tile_bytes_per_row(M, Mp, in_isz, out_isz)
    tb_cap = int(avail // per_row)
    tb_cap = max(8, min(tb_cap, 4096))
    tb_cap = _round_down(tb_cap, 128) if tb_cap >= 128 else _round_down(tb_cap, 8)
    tb_cap = max(tb_cap, 8)

    if B <= tb_cap:
        if num_tc >= 2 and B > 256:
            # Dual-TC chip: split a fits-in-one-tile batch across the cores
            # (the "parallel" grid axis is sharded across TensorCores).
            return min(tb_cap, _round_up(_cdiv(B, num_tc), 128))
        # Single-TC chip (v5e/v6e) or tiny batch: one whole-batch block,
        # zero per-step pipeline overhead.
        return B

    # B > tb_cap: must tile. On multi-TC chips, shrink tb (best effort) so the
    # step count is a multiple of num_tc and no core idles on the last step.
    tb = tb_cap
    if num_tc >= 2:
        tries = 0
        while tb > 128 and (_cdiv(B, tb) % num_tc) != 0 and tries < 16:
            tb -= 128
            tries += 1
        if (_cdiv(B, tb) % num_tc) != 0:
            tb = tb_cap                      # give up; keep the biggest tile
    return tb


def _vmem_limit_bytes(tb, M, Mp, in_isz, out_isz, limit_cap):
    usage = (tb * _tile_bytes_per_row(M, Mp, in_isz, out_isz)
             + 2 * in_isz * _weight_elems(M, Mp))
    limit = max(usage + (12 << 20), 32 << 20)
    # Respect the per-generation ceiling unless a (user-chosen) tile itself
    # genuinely needs more.
    return int(min(limit, max(limit_cap, usage + (8 << 20))))


def _cost_estimate(B, M, Mp, itemsize):
    matmul_flops = 2 * B * (M * H1 + H1 * H2 + H2 * H1 + H1 * Mp)
    elementwise = B * (H1 + H2 + H1 + Mp)                 # bias adds
    return pl.CostEstimate(
        flops=int(matmul_flops + elementwise),
        transcendentals=int(B * (H1 + H2 + H1)),          # sigmoids
        bytes_accessed=int(itemsize * (B * M + B * Mp + _weight_elems(M, Mp))),
    )


# ----------------------------------------------------------------------------
# Wrapper
# ----------------------------------------------------------------------------
def sae_forward(x, params, *, tb=None, io_dtype=None):
    """Run the fused SAE forward pass.

    x: (B, M). params: dict with w1..w4 stored as (in, out) and b1..b4 as (1, out).
    io_dtype: optional dtype (e.g. jnp.bfloat16) to cast x/weights/output to.
      bf16 I/O is the recommended production path (the kernel is HBM-bound, so
      it is ~2x faster on v5e/v6e); matmul accumulation and sigmoids stay f32.
      Upcast the returned reconstruction to f32 before computing a training loss.
    """
    if io_dtype is not None:
        x = x.astype(io_dtype)
    params = {k: v.astype(x.dtype) for k, v in params.items()}
    w1, b1 = params["w1"], params["b1"]
    w2, b2 = params["w2"], params["b2"]
    w3, b3 = params["w3"], params["b3"]
    w4, b4 = params["w4"], params["b4"]

    B, M = x.shape
    itemsize = jnp.dtype(x.dtype).itemsize
    out_isz = itemsize

    # Lane-align the OUTPUT side only: pad w4/b4 columns so the (tb, Mp) output
    # stores are unmasked. The padded output columns are exactly zero
    # (zero weights, zero bias) and are sliced off below.
    Mp = _round_up(M, LANE)
    pad = Mp - M
    if pad:
        w4 = jnp.pad(w4, ((0, 0), (0, pad)))
        b4 = jnp.pad(b4, ((0, 0), (0, pad)))

    vmem_cap, num_tc = _tpu_hw()
    tile_budget, limit_cap = _budgets(vmem_cap)

    if tb is None:
        tb = _pick_tb(B, M, Mp, itemsize, out_isz, tile_budget, num_tc)
    tb = max(1, min(tb, B))                   # never larger than the batch
    grid = (_cdiv(B, tb),)

    cost = _cost_estimate(B, M, Mp, itemsize)
    vmem_limit = _vmem_limit_bytes(tb, M, Mp, itemsize, out_isz, limit_cap)

    def build_and_call(single_buffer_weights):
        # Constant-index weight blocks: single-buffer them when supported to
        # free VMEM for a larger batch tile. x/out keep default (double)
        # buffering -- steady state is DMA-throughput-bound, not latency-bound.
        wkw = ({"pipeline_mode": pl.Buffered(1)}
               if single_buffer_weights else {})

        def rep(arr):
            shape = arr.shape
            return pl.BlockSpec(shape, lambda i, _n=len(shape): (0,) * _n, **wkw)

        return pl.pallas_call(
            sae_kernel,
            out_shape=jax.ShapeDtypeStruct((B, Mp), x.dtype),
            grid_spec=pltpu.PrefetchScalarGridSpec(
                num_scalar_prefetch=0,
                grid=grid,
                in_specs=[
                    pl.BlockSpec((tb, M), lambda i: (i, 0)),     # x tile
                    rep(w1), rep(b1),
                    rep(w2), rep(b2),
                    rep(w3), rep(b3),
                    rep(w4), rep(b4),
                ],
                out_specs=pl.BlockSpec((tb, Mp), lambda i: (i, 0)),
            ),
            compiler_params=pltpu.CompilerParams(
                dimension_semantics=("parallel",),
                vmem_limit_bytes=vmem_limit,
            ),
            cost_estimate=cost,
        )(x, w1, b1, w2, b2, w3, b3, w4, b4)

    if _buffered1_supported():
        try:
            out = build_and_call(True)
        except pltpu.LoweringException:
            # Narrow fallback: only the Pallas lowering rejection of
            # Buffered(1) takes the double-buffered-weights path.
            out = build_and_call(False)
    else:
        out = build_and_call(False)

    return out[:, :M] if pad else out


# ----------------------------------------------------------------------------
# Params + reference
# ----------------------------------------------------------------------------
def init_params(key, nb_movies):
    """Deterministic init; PyTorch Linear (out, in) weights transposed to (in, out)."""
    ks = jax.random.split(key, 8)

    def linear(kw, kb, fan_in, fan_out):
        bound = 1.0 / jnp.sqrt(fan_in)
        w_pt = jax.random.uniform(kw, (fan_out, fan_in), jnp.float32, -bound, bound)
        b = jax.random.uniform(kb, (1, fan_out), jnp.float32, -bound, bound)
        return w_pt.T, b

    w1, b1 = linear(ks[0], ks[1], nb_movies, H1)
    w2, b2 = linear(ks[2], ks[3], H1, H2)
    w3, b3 = linear(ks[4], ks[5], H2, H1)
    w4, b4 = linear(ks[6], ks[7], H1, nb_movies)
    return dict(w1=w1, b1=b1, w2=w2, b2=b2, w3=w3, b3=b3, w4=w4, b4=b4)


def sae_reference(x, p):
    """Plain-JAX reference mirroring the PyTorch forward (f32)."""
    h = jax.nn.sigmoid(x @ p["w1"] + p["b1"])
    h = jax.nn.sigmoid(h @ p["w2"] + p["b2"])
    h = jax.nn.sigmoid(h @ p["w3"] + p["b3"])
    return h @ p["w4"] + p["b4"]


# ----------------------------------------------------------------------------
# Demo / self-check
# ----------------------------------------------------------------------------
if __name__ == "__main__":
    # Synthetic "ratings matrix" rows (stand-in for the MovieLens-derived
    # training_set; ratings in {0, 0.5, ..., 5}, mostly zeros). No file I/O.
    def make_ratings(k, batch, nb_movies):
        k1, k2 = jax.random.split(k)
        raw = jax.random.uniform(k1, (batch, nb_movies), jnp.float32, 0.5, 5.0)
        mask = jax.random.bernoulli(k2, 0.2, (batch, nb_movies))
        return jnp.where(mask, jnp.round(raw * 2.0) / 2.0, 0.0).astype(jnp.float32)

    key = jax.random.PRNGKey(0)

    # --- case 1: tiny f32 batch, lane-aligned M -> single whole-batch block --
    nb_movies, batch = 256, 8
    k_x, k_p, key = jax.random.split(key, 3)
    x = make_ratings(k_x, batch, nb_movies)
    params = init_params(k_p, nb_movies)

    out = jax.block_until_ready(sae_forward(x, params))
    ref = sae_reference(x, params)
    assert out.shape == (batch, nb_movies)
    assert jnp.allclose(out, ref, atol=1e-4, rtol=1e-5), "f32 small-batch mismatch"

    # --- case 2: ragged M (not a multiple of 128) -> exercises lane padding --
    nb_movies2, batch2 = 300, 96
    k_x2, k_p2, key = jax.random.split(key, 3)
    x2 = make_ratings(k_x2, batch2, nb_movies2)
    params2 = init_params(k_p2, nb_movies2)

    out2 = jax.block_until_ready(sae_forward(x2, params2))
    ref2 = sae_reference(x2, params2)
    assert out2.shape == (batch2, nb_movies2)
    assert jnp.allclose(out2, ref2, atol=1e-4, rtol=1e-5), "f32 padded-M mismatch"

    # --- case 3: recommended production path: bf16 I/O (f32 accumulation) ---
    nb_movies3, batch3 = 512, 512
    k_x3, k_p3, key = jax.random.split(key, 3)
    x3 = make_ratings(k_x3, batch3, nb_movies3)
    params3 = init_params(k_p3, nb_movies3)

    out3 = jax.block_until_ready(
        sae_forward(x3, params3, io_dtype=jnp.bfloat16))
    ref3 = sae_reference(x3, params3)
    assert out3.shape == (batch3, nb_movies3)
    assert out3.dtype == jnp.bfloat16
    # bf16 reconstruction: upcast to f32 for comparison / loss computation.
    assert jnp.allclose(out3.astype(jnp.float32), ref3, atol=0.1, rtol=0.1), \
        "bf16 mismatch vs f32 reference"

    print("KERNEL_OK")
</pallas_src>

<mosaic_0001>
module attributes {stable_mosaic.version = 11 : i64} {
  func.func @sae_kernel(%arg0: i32, %arg1: memref<8x256xf32, #tpu.memory_space<vmem>>, %arg2: memref<256x20xf32, #tpu.memory_space<vmem>>, %arg3: memref<1x20xf32, #tpu.memory_space<vmem>>, %arg4: memref<20x10xf32, #tpu.memory_space<vmem>>, %arg5: memref<1x10xf32, #tpu.memory_space<vmem>>, %arg6: memref<10x20xf32, #tpu.memory_space<vmem>>, %arg7: memref<1x20xf32, #tpu.memory_space<vmem>>, %arg8: memref<20x256xf32, #tpu.memory_space<vmem>>, %arg9: memref<1x256xf32, #tpu.memory_space<vmem>>, %arg10: memref<8x256xf32, #tpu.memory_space<vmem>>) attributes {dimension_semantics = [#tpu.dimension_semantics<parallel>], iteration_bounds = array<i64: 1>, scalar_prefetch = 0 : i64, scratch_operands = 0 : i64, tpu.core_type = #tpu.core_type<tc>, window_params = [{transform_indices = @transform_0, window_bounds = array<i64: 8, 256>}, {pipeline_mode = #tpu.pipeline_mode<synchronous>, transform_indices = @transform_1, window_bounds = array<i64: 256, 20>}, {pipeline_mode = #tpu.pipeline_mode<synchronous>, transform_indices = @transform_2, window_bounds = array<i64: 1, 20>}, {pipeline_mode = #tpu.pipeline_mode<synchronous>, transform_indices = @transform_3, window_bounds = array<i64: 20, 10>}, {pipeline_mode = #tpu.pipeline_mode<synchronous>, transform_indices = @transform_4, window_bounds = array<i64: 1, 10>}, {pipeline_mode = #tpu.pipeline_mode<synchronous>, transform_indices = @transform_5, window_bounds = array<i64: 10, 20>}, {pipeline_mode = #tpu.pipeline_mode<synchronous>, transform_indices = @transform_6, window_bounds = array<i64: 1, 20>}, {pipeline_mode = #tpu.pipeline_mode<synchronous>, transform_indices = @transform_7, window_bounds = array<i64: 20, 256>}, {pipeline_mode = #tpu.pipeline_mode<synchronous>, transform_indices = @transform_8, window_bounds = array<i64: 1, 256>}, {transform_indices = @transform_9, window_bounds = array<i64: 8, 256>}]} {
    %c0 = arith.constant 0 : index
    %c0_0 = arith.constant 0 : index
    %0 = vector.load %arg1[%c0, %c0_0] : memref<8x256xf32, #tpu.memory_space<vmem>>, vector<8x256xf32>
    %c0_1 = arith.constant 0 : index
    %c0_2 = arith.constant 0 : index
    %1 = vector.load %arg2[%c0_1, %c0_2] : memref<256x20xf32, #tpu.memory_space<vmem>>, vector<256x20xf32>
    %cst = arith.constant dense<0.000000e+00> : vector<8x20xf32>
    %2 = tpu.matmul %0, %1, %cst {dimension_numbers = #tpu.dot_dimension_numbers<[1], [0], [0], [1], [0, 0, 1, 1], [], []>} : vector<8x256xf32>, vector<256x20xf32>, vector<8x20xf32> -> vector<8x20xf32>
    %c0_3 = arith.constant 0 : index
    %c0_4 = arith.constant 0 : index
    %3 = vector.load %arg3[%c0_3, %c0_4] : memref<1x20xf32, #tpu.memory_space<vmem>>, vector<1x20xf32>
    %4 = vector.broadcast %3 : vector<1x20xf32> to vector<8x20xf32>
    %5 = arith.addf %2, %4 : vector<8x20xf32>
    %6 = arith.negf %5 : vector<8x20xf32>
    %7 = math.exp %6 : vector<8x20xf32>
    %cst_5 = arith.constant 1.000000e+00 : f32
    %8 = vector.broadcast %cst_5 : f32 to vector<8x20xf32>
    %9 = arith.addf %8, %7 : vector<8x20xf32>
    %10 = arith.divf %8, %9 : vector<8x20xf32>
    %c0_6 = arith.constant 0 : index
    %c0_7 = arith.constant 0 : index
    %11 = vector.load %arg4[%c0_6, %c0_7] : memref<20x10xf32, #tpu.memory_space<vmem>>, vector<20x10xf32>
    %cst_8 = arith.constant dense<0.000000e+00> : vector<8x10xf32>
    %12 = tpu.matmul %10, %11, %cst_8 {dimension_numbers = #tpu.dot_dimension_numbers<[1], [0], [0], [1], [0, 0, 1, 1], [], []>} : vector<8x20xf32>, vector<20x10xf32>, vector<8x10xf32> -> vector<8x10xf32>
    %c0_9 = arith.constant 0 : index
    %c0_10 = arith.constant 0 : index
    %13 = vector.load %arg5[%c0_9, %c0_10] : memref<1x10xf32, #tpu.memory_space<vmem>>, vector<1x10xf32>
    %14 = vector.broadcast %13 : vector<1x10xf32> to vector<8x10xf32>
    %15 = arith.addf %12, %14 : vector<8x10xf32>
    %16 = arith.negf %15 : vector<8x10xf32>
    %17 = math.exp %16 : vector<8x10xf32>
    %cst_11 = arith.constant 1.000000e+00 : f32
    %18 = vector.broadcast %cst_11 : f32 to vector<8x10xf32>
    %19 = arith.addf %18, %17 : vector<8x10xf32>
    %20 = arith.divf %18, %19 : vector<8x10xf32>
    %c0_12 = arith.constant 0 : index
    %c0_13 = arith.constant 0 : index
    %21 = vector.load %arg6[%c0_12, %c0_13] : memref<10x20xf32, #tpu.memory_space<vmem>>, vector<10x20xf32>
    %cst_14 = arith.constant dense<0.000000e+00> : vector<8x20xf32>
    %22 = tpu.matmul %20, %21, %cst_14 {dimension_numbers = #tpu.dot_dimension_numbers<[1], [0], [0], [1], [0, 0, 1, 1], [], []>} : vector<8x10xf32>, vector<10x20xf32>, vector<8x20xf32> -> vector<8x20xf32>
    %c0_15 = arith.constant 0 : index
    %c0_16 = arith.constant 0 : index
    %23 = vector.load %arg7[%c0_15, %c0_16] : memref<1x20xf32, #tpu.memory_space<vmem>>, vector<1x20xf32>
    %24 = vector.broadcast %23 : vector<1x20xf32> to vector<8x20xf32>
    %25 = arith.addf %22, %24 : vector<8x20xf32>
    %26 = arith.negf %25 : vector<8x20xf32>
    %27 = math.exp %26 : vector<8x20xf32>
    %cst_17 = arith.constant 1.000000e+00 : f32
    %28 = vector.broadcast %cst_17 : f32 to vector<8x20xf32>
    %29 = arith.addf %28, %27 : vector<8x20xf32>
    %30 = arith.divf %28, %29 : vector<8x20xf32>
    %c0_18 = arith.constant 0 : index
    %c0_19 = arith.constant 0 : index
    %31 = vector.load %arg8[%c0_18, %c0_19] : memref<20x256xf32, #tpu.memory_space<vmem>>, vector<20x256xf32>
    %cst_20 = arith.constant dense<0.000000e+00> : vector<8x256xf32>
    %32 = tpu.matmul %30, %31, %cst_20 {dimension_numbers = #tpu.dot_dimension_numbers<[1], [0], [0], [1], [0, 0, 1, 1], [], []>} : vector<8x20xf32>, vector<20x256xf32>, vector<8x256xf32> -> vector<8x256xf32>
    %c0_21 = arith.constant 0 : index
    %c0_22 = arith.constant 0 : index
    %33 = vector.load %arg9[%c0_21, %c0_22] : memref<1x256xf32, #tpu.memory_space<vmem>>, vector<1x256xf32>
    %34 = vector.broadcast %33 : vector<1x256xf32> to vector<8x256xf32>
    %35 = arith.addf %32, %34 : vector<8x256xf32>
    %c0_23 = arith.constant 0 : index
    %c0_24 = arith.constant 0 : index
    %36 = vector.load %arg10[%c0_23, %c0_24] : memref<8x256xf32, #tpu.memory_space<vmem>>, vector<8x256xf32>
    tpu.vector_store %arg10[%c0_23, %c0_24], %35 {strides = array<i32>} : memref<8x256xf32, #tpu.memory_space<vmem>>, vector<8x256xf32>,
    return
  }
  func.func @transform_0(%arg0: i32) -> (i32, i32) {
    %c0_i32 = arith.constant 0 : i32
    %c0_i32_0 = arith.constant 0 : i32
    return %arg0, %c0_i32 : i32, i32
  }
  func.func @transform_1(%arg0: i32) -> (i32, i32) {
    %c0_i32 = arith.constant 0 : i32
    %c0_i32_0 = arith.constant 0 : i32
    %c0_i32_1 = arith.constant 0 : i32
    return %c0_i32, %c0_i32_0 : i32, i32
  }
  func.func @transform_2(%arg0: i32) -> (i32, i32) {
    %c0_i32 = arith.constant 0 : i32
    %c0_i32_0 = arith.constant 0 : i32
    %c0_i32_1 = arith.constant 0 : i32
    return %c0_i32, %c0_i32_0 : i32, i32
  }
  func.func @transform_3(%arg0: i32) -> (i32, i32) {
    %c0_i32 = arith.constant 0 : i32
    %c0_i32_0 = arith.constant 0 : i32
    %c0_i32_1 = arith.constant 0 : i32
    return %c0_i32, %c0_i32_0 : i32, i32
  }
  func.func @transform_4(%arg0: i32) -> (i32, i32) {
    %c0_i32 = arith.constant 0 : i32
    %c0_i32_0 = arith.constant 0 : i32
    %c0_i32_1 = arith.constant 0 : i32
    return %c0_i32, %c0_i32_0 : i32, i32
  }
  func.func @transform_5(%arg0: i32) -> (i32, i32) {
    %c0_i32 = arith.constant 0 : i32
    %c0_i32_0 = arith.constant 0 : i32
    %c0_i32_1 = arith.constant 0 : i32
    return %c0_i32, %c0_i32_0 : i32, i32
  }
  func.func @transform_6(%arg0: i32) -> (i32, i32) {
    %c0_i32 = arith.constant 0 : i32
    %c0_i32_0 = arith.constant 0 : i32
    %c0_i32_1 = arith.constant 0 : i32
    return %c0_i32, %c0_i32_0 : i32, i32
  }
  func.func @transform_7(%arg0: i32) -> (i32, i32) {
    %c0_i32 = arith.constant 0 : i32
    %c0_i32_0 = arith.constant 0 : i32
    %c0_i32_1 = arith.constant 0 : i32
    return %c0_i32, %c0_i32_0 : i32, i32
  }
  func.func @transform_8(%arg0: i32) -> (i32, i32) {
    %c0_i32 = arith.constant 0 : i32
    %c0_i32_0 = arith.constant 0 : i32
    %c0_i32_1 = arith.constant 0 : i32
    return %c0_i32, %c0_i32_0 : i32, i32
  }
  func.func @transform_9(%arg0: i32) -> (i32, i32) {
    %c0_i32 = arith.constant 0 : i32
    %c0_i32_0 = arith.constant 0 : i32
    return %arg0, %c0_i32 : i32, i32
  }
}

</mosaic_0001>

<llo_original>
// kernel: tpu_custom_call.1
$region0: #{tpu_custom_call.1}
  #allocation0 [shape = 'u32[]', space=smem, size = 0x4, offset = 0x4, fixed_abs, tag = 'smem constant byte address 0x4 - core index']
  #allocation1 [shape = 'u32[144,128]{1,0:T(1,128)}', space=vmem, size = 0x12000, scoped, tag = 'internal scratch']
  %s0 = inlined_call_operand.vmem [shape: f32[8,256], index: 0, kind: input, shape index: {}]
  %s1 = inlined_call_operand.vmem [shape: f32[256,20], index: 1, kind: input, shape index: {}]
  %s2 = inlined_call_operand.vmem [shape: f32[1,20], index: 2, kind: input, shape index: {}]
  %s3 = inlined_call_operand.vmem [shape: f32[20,10], index: 3, kind: input, shape index: {}]
  %s4 = inlined_call_operand.vmem [shape: f32[1,10], index: 4, kind: input, shape index: {}]
  %s5 = inlined_call_operand.vmem [shape: f32[10,20], index: 5, kind: input, shape index: {}]
  %s6 = inlined_call_operand.vmem [shape: f32[1,20], index: 6, kind: input, shape index: {}]
  %s7 = inlined_call_operand.vmem [shape: f32[20,256], index: 7, kind: input, shape index: {}]
  %s8 = inlined_call_operand.vmem [shape: f32[1,256], index: 8, kind: input, shape index: {}]
  %s9 = inlined_call_operand.hbm [shape: f32[8,256], index: 9, kind: output, shape index: {}]
  %s10 = sld [smem:[#allocation0]]
  $region46: #{tpu_custom_call.1} parent=0
    _
  %s12 = ssub.s32 1, %s10
  %s13 = scalar_select 0, %s12, %s10
  $region1: #{tpu_custom_call.1} parent=0
    #allocation2 [shape = 'u8[8192]{0}', space=vmem, size = 0x2000, scoped, tag = 'output window, operand 0, single buffered']
    #allocation3 [shape = 's32[1]{0}', space=sflag, size = 0x4, scoped, tag = 'scoped memory for tpu_custom_call.1']
    %14 = vsyncpa [#allocation3], 0
    // Predicated region
    $region2: #{tpu_custom_call.1} parent=1 // pred_check
      _
    $region3: #{tpu_custom_call.1} parent=1 // pred_check_branch
      %16 = sbr.rel (0) target = $region5
    $region4: #{tpu_custom_call.1} parent=1 // pred_region
      _
    $region5: #{tpu_custom_call.1} parent=1 // pred_fallthru
      _
    // Predicated region
    $region6: #{tpu_custom_call.1} parent=1 // pred_check
      _
    $region7: #{tpu_custom_call.1} parent=1 // pred_check_branch
      %18 = sbr.rel (0) target = $region9
    $region8: #{tpu_custom_call.1} parent=1 // pred_region
      _
    $region9: #{tpu_custom_call.1} parent=1 // pred_fallthru
      _
    // Predicated region
    $region10: #{tpu_custom_call.1} parent=1 // pred_check
      _
    $region11: #{tpu_custom_call.1} parent=1 // pred_check_branch
      %20 = sbr.rel (0) target = $region13
    $region12: #{tpu_custom_call.1} parent=1 // pred_region
      _
    $region13: #{tpu_custom_call.1} parent=1 // pred_fallthru
      _
    // Predicated region
    $region14: #{tpu_custom_call.1} parent=1 // pred_check
      _
    $region15: #{tpu_custom_call.1} parent=1 // pred_check_branch
      %22 = sbr.rel (0) target = $region17
    $region16: #{tpu_custom_call.1} parent=1 // pred_region
      _
    $region17: #{tpu_custom_call.1} parent=1 // pred_fallthru
      _
    // Predicated region
    $region18: #{tpu_custom_call.1} parent=1 // pred_check
      _
    $region19: #{tpu_custom_call.1} parent=1 // pred_check_branch
      %24 = sbr.rel (0) target = $region21
    $region20: #{tpu_custom_call.1} parent=1 // pred_region
      _
    $region21: #{tpu_custom_call.1} parent=1 // pred_fallthru
      _
    // Predicated region
    $region22: #{tpu_custom_call.1} parent=1 // pred_check
      _
    $region23: #{tpu_custom_call.1} parent=1 // pred_check_branch
      %26 = sbr.rel (0) target = $region25
    $region24: #{tpu_custom_call.1} parent=1 // pred_region
      _
    $region25: #{tpu_custom_call.1} parent=1 // pred_fallthru
      _
    // Predicated region
    $region26: #{tpu_custom_call.1} parent=1 // pred_check
      _
    $region27: #{tpu_custom_call.1} parent=1 // pred_check_branch
      %28 = sbr.rel (0) target = $region29
    $region28: #{tpu_custom_call.1} parent=1 // pred_region
      _
    $region29: #{tpu_custom_call.1} parent=1 // pred_fallthru
      _
    // Predicated region
    $region30: #{tpu_custom_call.1} parent=1 // pred_check
      _
    $region31: #{tpu_custom_call.1} parent=1 // pred_check_branch
      %30 = sbr.rel (0) target = $region33
    $region32: #{tpu_custom_call.1} parent=1 // pred_region
      _
    $region33: #{tpu_custom_call.1} parent=1 // pred_fallthru
      _
    // Predicated region
    $region34: #{tpu_custom_call.1} parent=1 // pred_check
      _
    $region35: #{tpu_custom_call.1} parent=1 // pred_check_branch
      %32 = sbr.rel (0) target = $region37
    $region36: #{tpu_custom_call.1} parent=1 // pred_region
      _
    $region37: #{tpu_custom_call.1} parent=1 // pred_fallthru
      _
    %v33 = vld [vmem:[%s0] sm:$0xff]
    %v34 = vld [vmem:[%s0 + $0x8] sm:$0xff]
    %v35 = vld [vmem:[%s1] sm:$0xff]
    %v36 = vld [vmem:[%s1 + $0x8] sm:$0xff]
    %v37 = vld [vmem:[%s1 + $0x10] sm:$0xff]
    %v38 = vld [vmem:[%s1 + $0x18] sm:$0xff]
    %v39 = vld [vmem:[%s1 + $0x20] sm:$0xff]
    %v40 = vld [vmem:[%s1 + $0x28] sm:$0xff]
    %v41 = vld [vmem:[%s1 + $0x30] sm:$0xff]
    %v42 = vld [vmem:[%s1 + $0x38] sm:$0xff]
    %v43 = vld [vmem:[%s1 + $0x40] sm:$0xff]
    %v44 = vld [vmem:[%s1 + $0x48] sm:$0xff]
    %v45 = vld [vmem:[%s1 + $0x50] sm:$0xff]
    %v46 = vld [vmem:[%s1 + $0x58] sm:$0xff]
    %v47 = vld [vmem:[%s1 + $0x60] sm:$0xff]
    %v48 = vld [vmem:[%s1 + $0x68] sm:$0xff]
    %v49 = vld [vmem:[%s1 + $0x70] sm:$0xff]
    %v50 = vld [vmem:[%s1 + $0x78] sm:$0xff]
    %v51 = vld [vmem:[%s1 + $0x80] sm:$0xff]
    %v52 = vld [vmem:[%s1 + $0x88] sm:$0xff]
    %v53 = vld [vmem:[%s1 + $0x90] sm:$0xff]
    %v54 = vld [vmem:[%s1 + $0x98] sm:$0xff]
    %v55 = vld [vmem:[%s1 + $0xa0] sm:$0xff]
    %v56 = vld [vmem:[%s1 + $0xa8] sm:$0xff]
    %v57 = vld [vmem:[%s1 + $0xb0] sm:$0xff]
    %v58 = vld [vmem:[%s1 + $0xb8] sm:$0xff]
    %v59 = vld [vmem:[%s1 + $0xc0] sm:$0xff]
    %v60 = vld [vmem:[%s1 + $0xc8] sm:$0xff]
    %v61 = vld [vmem:[%s1 + $0xd0] sm:$0xff]
    %v62 = vld [vmem:[%s1 + $0xd8] sm:$0xff]
    %v63 = vld [vmem:[%s1 + $0xe0] sm:$0xff]
    %v64 = vld [vmem:[%s1 + $0xe8] sm:$0xff]
    %v65 = vld [vmem:[%s1 + $0xf0] sm:$0xff]
    %v66 = vld [vmem:[%s1 + $0xf8] sm:$0xff]
    %v67 = vld [vmem:[%s2] sm:$0x1]
    %v69 = vlaneseq
    %v70 = vshrl.u32 %v69, 7
    %v71 = vsub.s32 0, %v70
    %v72 = vrot.slane %v67, %v71
    %74 = vmatprep.subr.mxu0 0.0
    %75 = vmatpush1.msra.mxu0 %v50
    %76 = vmatprep.subr.mxu0 0.0
    %77 = vmatpush1.msra.mxu0 %v49
    %78 = vmatprep.subr.mxu0 0.0
    %79 = vmatpush1.msra.mxu0 %v48
    %80 = vmatprep.subr.mxu0 0.0
    %81 = vmatpush1.msra.mxu0 %v47
    %82 = vmatprep.subr.mxu0 0.0
    %83 = vmatpush1.msra.mxu0 %v46
    %84 = vmatprep.subr.mxu0 0.0
    %85 = vmatpush1.msra.mxu0 %v45
    %86 = vmatprep.subr.mxu0 0.0
    %87 = vmatpush1.msra.mxu0 %v44
    %88 = vmatprep.subr.mxu0 0.0
    %89 = vmatpush1.msra.mxu0 %v43
    %90 = vmatprep.subr.mxu0 0.0
    %91 = vmatpush1.msra.mxu0 %v42
    %92 = vmatprep.subr.mxu0 0.0
    %93 = vmatpush1.msra.mxu0 %v41
    %94 = vmatprep.subr.mxu0 0.0
    %95 = vmatpush1.msra.mxu0 %v40
    %96 = vmatprep.subr.mxu0 0.0
    %97 = vmatpush1.msra.mxu0 %v39
    %98 = vmatprep.subr.mxu0 0.0
    %99 = vmatpush1.msra.mxu0 %v38
    %100 = vmatprep.subr.mxu0 0.0
    %101 = vmatpush1.msra.mxu0 %v37
    %102 = vmatprep.subr.mxu0 0.0
    %103 = vmatpush1.msra.mxu0 %v36
    %104 = vmatprep.subr.mxu0 0.0
    %105 = vmatpush1.msra.mxu0 %v35
    %106 = vmatprep.subr.mxu0 0.0
    %107 = vmatpush2.msra.mxu0 %v66
    %108 = vmatprep.subr.mxu0 0.0
    %109 = vmatpush2.msra.mxu0 %v65
    %110 = vmatprep.subr.mxu0 0.0
    %111 = vmatpush2.msra.mxu0 %v64
    %112 = vmatprep.subr.mxu0 0.0
    %113 = vmatpush2.msra.mxu0 %v63
    %114 = vmatprep.subr.mxu0 0.0
    %115 = vmatpush2.msra.mxu0 %v62
    %116 = vmatprep.subr.mxu0 0.0
    %117 = vmatpush2.msra.mxu0 %v61
    %118 = vmatprep.subr.mxu0 0.0
    %119 = vmatpush2.msra.mxu0 %v60
    %120 = vmatprep.subr.mxu0 0.0
    %121 = vmatpush2.msra.mxu0 %v59
    %122 = vmatprep.subr.mxu0 0.0
    %123 = vmatpush2.msra.mxu0 %v58
    %124 = vmatprep.subr.mxu0 0.0
    %125 = vmatpush2.msra.mxu0 %v57
    %126 = vmatprep.subr.mxu0 0.0
    %127 = vmatpush2.msra.mxu0 %v56
    %128 = vmatprep.subr.mxu0 0.0
    %129 = vmatpush2.msra.mxu0 %v55
    %130 = vmatprep.subr.mxu0 0.0
    %131 = vmatpush2.msra.mxu0 %v54
    %132 = vmatprep.subr.mxu0 0.0
    %133 = vmatpush2.msra.mxu0 %v53
    %134 = vmatprep.subr.mxu0 0.0
    %135 = vmatpush2.msra.mxu0 %v52
    %136 = vmatprep.subr.mxu0 0.0
    %137 = vmatpush2.msra.mxu0 %v51
    %138 = vmatprep.mubr.f32.mxu0 %v34
    %139 = vmatmul.mubr.f32.gmra.mxu0 %v33
    %v140 = vpop.f32.mrf.mxu0
    %v141 = vadd.f32 %v72, %v140
    %v142 = vpop.f32.mrf.mxu0
    %143 = vdwg.mxu0
    %v144 = vxor.u32 %v141, 2147483648
    %v145 = vmul.f32 %v144, 1.442695
    %v146 = vpow.pop %v145
    %v147 = vadd.f32 %v146, 1.0
    %v148 = vrcp.pop %v147
    %v149 = vmul.f32 1.0, %v148
    %v150 = vld [vmem:[%s3] sm:$0xff]
    %v151 = vld [vmem:[%s3 + $0x8] sm:$0xff]
    %v152 = vld [vmem:[%s3 + $0x10] sm:$0xf]
    %v153 = vld [vmem:[%s4] sm:$0x1]
    %v155 = vlaneseq
    %v156 = vshrl.u32 %v155, 7
    %v157 = vsub.s32 0, %v156
    %v158 = vrot.slane %v153, %v157
    %vm160 = vcmask 162816
    %v162 = vsel %vm160, %v149, 0
    %vm164 = vcmask 1043456
    %v166 = vsel %vm164, %v152, 0
    %168 = vmatprep.subr.mxu0 0.0
    %169 = vmatpush1.msra.mxu0 0.0
    %170 = vmatprep.subr.mxu0 0.0
    %171 = vmatpush1.msra.mxu0 0.0
    %172 = vmatprep.subr.mxu0 0.0
    %173 = vmatpush1.msra.mxu0 0.0
    %174 = vmatprep.subr.mxu0 0.0
    %175 = vmatpush1.msra.mxu0 0.0
    %176 = vmatprep.subr.mxu0 0.0
    %177 = vmatpush1.msra.mxu0 0.0
    %178 = vmatprep.subr.mxu0 0.0
    %179 = vmatpush1.msra.mxu0 0.0
    %180 = vmatprep.subr.mxu0 0.0
    %181 = vmatpush1.msra.mxu0 0.0
    %182 = vmatprep.subr.mxu0 0.0
    %183 = vmatpush1.msra.mxu0 0.0
    %184 = vmatprep.subr.mxu0 0.0
    %185 = vmatpush1.msra.mxu0 0.0
    %186 = vmatprep.subr.mxu0 0.0
    %187 = vmatpush1.msra.mxu0 0.0
    %188 = vmatprep.subr.mxu0 0.0
    %189 = vmatpush1.msra.mxu0 0.0
    %190 = vmatprep.subr.mxu0 0.0
    %191 = vmatpush1.msra.mxu0 0.0
    %192 = vmatprep.subr.mxu0 0.0
    %193 = vmatpush1.msra.mxu0 0.0
    %194 = vmatprep.subr.mxu0 0.0
    %195 = vmatpush1.msra.mxu0 %v166
    %196 = vmatprep.subr.mxu0 0.0
    %197 = vmatpush1.msra.mxu0 %v151
    %198 = vmatprep.subr.mxu0 0.0
    %199 = vmatpush1.msra.mxu0 %v150
    %200 = vmatprep.subr.mxu0 0.0
    %201 = vmatpush2.msra.mxu0 0.0
    %202 = vmatprep.subr.mxu0 0.0
    %203 = vmatpush2.msra.mxu0 0.0
    %204 = vmatprep.subr.mxu0 0.0
    %205 = vmatpush2.msra.mxu0 0.0
    %206 = vmatprep.subr.mxu0 0.0
    %207 = vmatpush2.msra.mxu0 0.0
    %208 = vmatprep.subr.mxu0 0.0
    %209 = vmatpush2.msra.mxu0 0.0
    %210 = vmatprep.subr.mxu0 0.0
    %211 = vmatpush2.msra.mxu0 0.0
    %212 = vmatprep.subr.mxu0 0.0
    %213 = vmatpush2.msra.mxu0 0.0
    %214 = vmatprep.subr.mxu0 0.0
    %215 = vmatpush2.msra.mxu0 0.0
    %216 = vmatprep.subr.mxu0 0.0
    %217 = vmatpush2.msra.mxu0 0.0
    %218 = vmatprep.subr.mxu0 0.0
    %219 = vmatpush2.msra.mxu0 0.0
    %220 = vmatprep.subr.mxu0 0.0
    %221 = vmatpush2.msra.mxu0 0.0
    %222 = vmatprep.subr.mxu0 0.0
    %223 = vmatpush2.msra.mxu0 0.0
    %224 = vmatprep.subr.mxu0 0.0
    %225 = vmatpush2.msra.mxu0 0.0
    %226 = vmatprep.subr.mxu0 0.0
    %227 = vmatpush2.msra.mxu0 0.0
    %228 = vmatprep.subr.mxu0 0.0
    %229 = vmatpush2.msra.mxu0 0.0
    %230 = vmatprep.subr.mxu0 0.0
    %231 = vmatpush2.msra.mxu0 0.0
    %232 = vmatprep.mubr.f32.mxu0 0.0
    %233 = vmatmul.mubr.f32.gmra.mxu0 %v162
    %v234 = vpop.f32.mrf.mxu0
    %v235 = vadd.f32 %v158, %v234
    %v236 = vpop.f32.mrf.mxu0
    %237 = vdwg.mxu0
    %v238 = vxor.u32 %v235, 2147483648
    %v239 = vmul.f32 %v238, 1.442695
    %v240 = vpow.pop %v239
    %v241 = vadd.f32 %v240, 1.0
    %v242 = vrcp.pop %v241
    %v243 = vmul.f32 1.0, %v242
    %v244 = vld [vmem:[%s5] sm:$0xff]
    %v245 = vld [vmem:[%s5 + $0x8] sm:$0x3]
    %v246 = vld [vmem:[%s6] sm:$0x1]
    %v248 = vlaneseq
    %v249 = vshrl.u32 %v248, 7
    %v250 = vsub.s32 0, %v249
    %v251 = vrot.slane %v246, %v250
    %vm253 = vcmask 80896
    %v255 = vsel %vm253, %v243, 0
    %vm257 = vcmask 1041408
    %v259 = vsel %vm257, %v245, 0
    %261 = vmatprep.subr.mxu0 0.0
    %262 = vmatpush1.msra.mxu0 0.0
    %263 = vmatprep.subr.mxu0 0.0
    %264 = vmatpush1.msra.mxu0 0.0
    %265 = vmatprep.subr.mxu0 0.0
    %266 = vmatpush1.msra.mxu0 0.0
    %267 = vmatprep.subr.mxu0 0.0
    %268 = vmatpush1.msra.mxu0 0.0
    %269 = vmatprep.subr.mxu0 0.0
    %270 = vmatpush1.msra.mxu0 0.0
    %271 = vmatprep.subr.mxu0 0.0
    %272 = vmatpush1.msra.mxu0 0.0
    %273 = vmatprep.subr.mxu0 0.0
    %274 = vmatpush1.msra.mxu0 0.0
    %275 = vmatprep.subr.mxu0 0.0
    %276 = vmatpush1.msra.mxu0 0.0
    %277 = vmatprep.subr.mxu0 0.0
    %278 = vmatpush1.msra.mxu0 0.0
    %279 = vmatprep.subr.mxu0 0.0
    %280 = vmatpush1.msra.mxu0 0.0
    %281 = vmatprep.subr.mxu0 0.0
    %282 = vmatpush1.msra.mxu0 0.0
    %283 = vmatprep.subr.mxu0 0.0
    %284 = vmatpush1.msra.mxu0 0.0
    %285 = vmatprep.subr.mxu0 0.0
    %286 = vmatpush1.msra.mxu0 0.0
    %287 = vmatprep.subr.mxu0 0.0
    %288 = vmatpush1.msra.mxu0 0.0
    %289 = vmatprep.subr.mxu0 0.0
    %290 = vmatpush1.msra.mxu0 %v259
    %291 = vmatprep.subr.mxu0 0.0
    %292 = vmatpush1.msra.mxu0 %v244
    %293 = vmatprep.subr.mxu0 0.0
    %294 = vmatpush2.msra.mxu0 0.0
    %295 = vmatprep.subr.mxu0 0.0
    %296 = vmatpush2.msra.mxu0 0.0
    %297 = vmatprep.subr.mxu0 0.0
    %298 = vmatpush2.msra.mxu0 0.0
    %299 = vmatprep.subr.mxu0 0.0
    %300 = vmatpush2.msra.mxu0 0.0
    %301 = vmatprep.subr.mxu0 0.0
    %302 = vmatpush2.msra.mxu0 0.0
    %303 = vmatprep.subr.mxu0 0.0
    %304 = vmatpush2.msra.mxu0 0.0
    %305 = vmatprep.subr.mxu0 0.0
    %306 = vmatpush2.msra.mxu0 0.0
    %307 = vmatprep.subr.mxu0 0.0
    %308 = vmatpush2.msra.mxu0 0.0
    %309 = vmatprep.subr.mxu0 0.0
    %310 = vmatpush2.msra.mxu0 0.0
    %311 = vmatprep.subr.mxu0 0.0
    %312 = vmatpush2.msra.mxu0 0.0
    %313 = vmatprep.subr.mxu0 0.0
    %314 = vmatpush2.msra.mxu0 0.0
    %315 = vmatprep.subr.mxu0 0.0
    %316 = vmatpush2.msra.mxu0 0.0
    %317 = vmatprep.subr.mxu0 0.0
    %318 = vmatpush2.msra.mxu0 0.0
    %319 = vmatprep.subr.mxu0 0.0
    %320 = vmatpush2.msra.mxu0 0.0
    %321 = vmatprep.subr.mxu0 0.0
    %322 = vmatpush2.msra.mxu0 0.0
    %323 = vmatprep.subr.mxu0 0.0
    %324 = vmatpush2.msra.mxu0 0.0
    %325 = vmatprep.mubr.f32.mxu0 0.0
    %326 = vmatmul.mubr.f32.gmra.mxu0 %v255
    %v327 = vpop.f32.mrf.mxu0
    %v328 = vadd.f32 %v251, %v327
    %v329 = vpop.f32.mrf.mxu0
    %330 = vdwg.mxu0
    %v331 = vxor.u32 %v328, 2147483648
    %v332 = vmul.f32 %v331, 1.442695
    %v333 = vpow.pop %v332
    %v334 = vadd.f32 %v333, 1.0
    %v335 = vrcp.pop %v334
    %v336 = vmul.f32 1.0, %v335
    %v337 = vld [vmem:[%s7] sm:$0xff]
    %v338 = vld [vmem:[%s7 + $0x8] sm:$0xff]
    %v339 = vld [vmem:[%s7 + $0x10] sm:$0xff]
    %v340 = vld [vmem:[%s7 + $0x18] sm:$0xff]
    %v341 = vld [vmem:[%s7 + $0x20] sm:$0xf]
    %v342 = vld [vmem:[%s7 + $0x28] sm:$0xf]
    %v343 = vld [vmem:[%s8] sm:$0x3]
    %v345 = vlaneseq
    %v346 = vshrl.u32 %v345, 7
    %v347 = vsub.s32 0, %v346
    %v348 = vrot.slane %v343, %v347
    %v349 = vlaneseq
    %v350 = vshrl.u32 %v349, 7
    %v351 = vsub.s32 1, %v350
    %v352 = vrot.slane %v343, %v351
    %v356 = vsel %vm160, %v336, 0
    %v359 = vsel %vm164, %v341, 0
    %v362 = vsel %vm164, %v342, 0
    %364 = vmatprep.subr.mxu0 0.0
    %365 = vmatpush1.msra.mxu0 0.0
    %366 = vmatprep.subr.mxu0 0.0
    %367 = vmatpush1.msra.mxu0 0.0
    %368 = vmatprep.subr.mxu0 0.0
    %369 = vmatpush1.msra.mxu0 0.0
    %370 = vmatprep.subr.mxu0 0.0
    %371 = vmatpush1.msra.mxu0 0.0
    %372 = vmatprep.subr.mxu0 0.0
    %373 = vmatpush1.msra.mxu0 0.0
    %374 = vmatprep.subr.mxu0 0.0
    %375 = vmatpush1.msra.mxu0 0.0
    %376 = vmatprep.subr.mxu0 0.0
    %377 = vmatpush1.msra.mxu0 0.0
    %378 = vmatprep.subr.mxu0 0.0
    %379 = vmatpush1.msra.mxu0 0.0
    %380 = vmatprep.subr.mxu0 0.0
    %381 = vmatpush1.msra.mxu0 0.0
    %382 = vmatprep.subr.mxu0 0.0
    %383 = vmatpush1.msra.mxu0 0.0
    %384 = vmatprep.subr.mxu0 0.0
    %385 = vmatpush1.msra.mxu0 0.0
    %386 = vmatprep.subr.mxu0 0.0
    %387 = vmatpush1.msra.mxu0 0.0
    %388 = vmatprep.subr.mxu0 0.0
    %389 = vmatpush1.msra.mxu0 0.0
    %390 = vmatprep.subr.mxu0 %v362
    %391 = vmatpush1.msra.mxu0 %v359
    %392 = vmatprep.subr.mxu0 %v340
    %393 = vmatpush1.msra.mxu0 %v339
    %394 = vmatprep.subr.mxu0 %v338
    %395 = vmatpush1.msra.mxu0 %v337
    %396 = vmatprep.subr.mxu0 0.0
    %397 = vmatpush2.msra.mxu0 0.0
    %398 = vmatprep.subr.mxu0 0.0
    %399 = vmatpush2.msra.mxu0 0.0
    %400 = vmatprep.subr.mxu0 0.0
    %401 = vmatpush2.msra.mxu0 0.0
    %402 = vmatprep.subr.mxu0 0.0
    %403 = vmatpush2.msra.mxu0 0.0
    %404 = vmatprep.subr.mxu0 0.0
    %405 = vmatpush2.msra.mxu0 0.0
    %406 = vmatprep.subr.mxu0 0.0
    %407 = vmatpush2.msra.mxu0 0.0
    %408 = vmatprep.subr.mxu0 0.0
    %409 = vmatpush2.msra.mxu0 0.0
    %410 = vmatprep.subr.mxu0 0.0
    %411 = vmatpush2.msra.mxu0 0.0
    %412 = vmatprep.subr.mxu0 0.0
    %413 = vmatpush2.msra.mxu0 0.0
    %414 = vmatprep.subr.mxu0 0.0
    %415 = vmatpush2.msra.mxu0 0.0
    %416 = vmatprep.subr.mxu0 0.0
    %417 = vmatpush2.msra.mxu0 0.0
    %418 = vmatprep.subr.mxu0 0.0
    %419 = vmatpush2.msra.mxu0 0.0
    %420 = vmatprep.subr.mxu0 0.0
    %421 = vmatpush2.msra.mxu0 0.0
    %422 = vmatprep.subr.mxu0 0.0
    %423 = vmatpush2.msra.mxu0 0.0
    %424 = vmatprep.subr.mxu0 0.0
    %425 = vmatpush2.msra.mxu0 0.0
    %426 = vmatprep.subr.mxu0 0.0
    %427 = vmatpush2.msra.mxu0 0.0
    %428 = vmatprep.mubr.f32.mxu0 0.0
    %429 = vmatmul.mubr.f32.gmra.mxu0 %v356
    %v430 = vpop.f32.mrf.mxu0
    %v431 = vadd.f32 %v348, %v430
    %v432 = vpop.f32.mrf.mxu0
    %v433 = vadd.f32 %v352, %v432
    %434 = vdwg.mxu0
    %435 = vst [vmem:[#allocation2] sm:$0xff] %v431
    %436 = vst [vmem:[#allocation2 + $0x8] sm:$0xff] %v433
    // Predicated region
    $region38: #{tpu_custom_call.1} parent=1 // pred_check
      _
    $region39: #{tpu_custom_call.1} parent=1 // pred_check_branch
      %438 = sbr.rel (0) target = $region41
    $region40: #{tpu_custom_call.1} parent=1 // pred_region
      %s440 = ssub.s32 256, 256
      %441 = vsyncadd [#allocation3], %s440
      %s443 = sshll.u32 [#allocation2], 4
      %s444 = int_to_ptr.vmem [resolvable:$true] %s443
      %446 = dma.vmem_to_hbm [thread:$0]  %s444, 256, %s9, [#allocation3]
    $region41: #{tpu_custom_call.1} parent=1 // pred_fallthru
      _
    // Predicated region
    $region42: #{tpu_custom_call.1} parent=1 // pred_check
      _
    $region43: #{tpu_custom_call.1} parent=1 // pred_check_branch
      %448 = sbr.rel (0) target = $region45
    $region44: #{tpu_custom_call.1} parent=1 // pred_region
      %449 = dma.done [#allocation3], 256
    $region45: #{tpu_custom_call.1} parent=1 // pred_fallthru
      _
    %450 = vsyncpa [#allocation3], 1

</llo_original>
